<compile_context>
chip_gen: v6e
topology: v6e:2x2x1
jax: 0.10.0
libtpu: 0.0.40
codegen_flags: <defaults>
</compile_context>

<pallas_src>
import functools
import math

import jax
import jax.numpy as jnp
from jax.experimental import pallas as pl
from jax.experimental.pallas import tpu as pltpu


def _cdiv(a, b):
    return (a + b - 1) // b


def _chip_config():
    """Returns (per-step VMEM working-set budget, vmem_limit_bytes, num_cores)."""
    kind = ""
    try:
        kind = jax.devices()[0].device_kind.lower()
    except Exception:
        pass
    is_v7 = "7" in kind

    vmem_cap = None
    try:
        vmem_cap = int(pltpu.get_tpu_info().vmem_capacity_bytes)
    except Exception:
        vmem_cap = None

    big_vmem = (not is_v7) and (
        (vmem_cap is not None and vmem_cap >= 100 * 1024 * 1024)
        or ("v5" in kind) or ("v6" in kind))

    if big_vmem:
        # v5e / v6e: 128 MiB VMEM, single TensorCore -> bigger blocks, 1 core.
        return 72 * 1024 * 1024, 96 * 1024 * 1024, 1
    # v7x (64 MiB per TC, 2 TCs) or unknown chip: conservative budget.
    return 36 * 1024 * 1024, 48 * 1024 * 1024, (2 if is_v7 else 1)


def _loss_ls_kernel(pred_ref, tgt_ref, mask_ref, num_ref, num_acc,
                    *, confidence, off_value, label_entropy,
                    n_rows, tile_rows, tiles_per_core):
    c = pl.program_id(0)          # core-split axis ("parallel")
    i = pl.program_id(1)          # tile axis within a core ("arbitrary")
    n_i = pl.num_programs(1)

    @pl.when(i == 0)
    def _():
        num_acc[...] = jnp.zeros_like(num_acc)

    tgt = tgt_ref[...]                                   # (TM, 1) int32
    msk = mask_ref[...].astype(jnp.float32)              # (TM, 1)

    # Row-validity for the ragged tail / clamped duplicate tiles (computed from
    # the UN-clamped tile index, so duplicate tiles contribute exactly zero).
    tile_idx = c * tiles_per_core + i
    row_start = tile_idx * tile_rows
    rows = row_start + jax.lax.broadcasted_iota(jnp.int32, (tile_rows, 1), 0)
    valid = rows < n_rows

    # Algebraic simplification: sum_v labels*log(labels) == label_entropy (const)
    # and sum_v labels*pred collapses to a single fused weighted lane-reduction.
    # The native->f32 cast stays inside the expression (no f32 temp statement).
    cols = jax.lax.broadcasted_iota(jnp.int32, pred_ref.shape, 1)
    weights = jnp.where(cols == tgt, confidence, off_value)          # (TM, V)
    row_dot = jnp.sum(weights * pred_ref[...].astype(jnp.float32),
                      axis=1, keepdims=True)                         # (TM, 1)
    row_loss = label_entropy - row_dot

    # NaN-safe accumulation: select away invalid rows instead of relying on
    # 0 * (possibly non-finite stale data).
    num_acc[...] += jnp.where(valid, row_loss * msk, 0.0)

    @pl.when(i == n_i - 1)
    def _():
        num_ref[...] = jnp.broadcast_to(jnp.sum(num_acc[...]), num_ref.shape)


def loss_with_ls(prediction, target, mask, smooth, *, max_tile_rows=2048):
    """prediction: (B, T, V) log-probs (any float dtype); target, mask: (B, T)."""
    B, T, V = prediction.shape
    confidence = 1.0 - smooth
    off_value = smooth / (V - 1)

    # Per-row constant sum_v labels*log(labels), with xlogy(0,0) = 0 handling.
    label_entropy = 0.0
    if confidence > 0.0:
        label_entropy += confidence * math.log(confidence)
    if off_value > 0.0:
        label_entropy += (V - 1) * off_value * math.log(off_value)

    N = B * T
    pred = prediction.reshape(N, V)                 # native dtype, no upcast
    tgt = target.reshape(N, 1).astype(jnp.int32)
    msk = mask.reshape(N, 1)

    block_budget, vmem_limit, num_cores = _chip_config()

    # Per-row working set: double-buffered native pred block plus headroom for
    # the f32-wide intermediates (weights / cast / product) of the fused
    # reduction that the compiler may materialize in VMEM.
    itemsize = jnp.dtype(pred.dtype).itemsize
    bytes_per_row = V * (2 * itemsize + 3 * 4)
    n_rows_padded = _cdiv(N, 8) * 8
    tile_rows = min(max_tile_rows, block_budget // bytes_per_row, n_rows_padded)
    tile_rows = max(8, (int(tile_rows) // 8) * 8)

    n_tiles = _cdiv(N, tile_rows)
    if n_tiles < num_cores:
        num_cores = 1
    tiles_per_core = _cdiv(n_tiles, num_cores)

    def row_block(c, i):
        # Clamp so no block starts fully past the array; duplicate tiles are
        # zeroed inside the kernel via the row-validity select.
        return (jnp.minimum(c * tiles_per_core + i, n_tiles - 1), 0)

    def out_block(c, i):
        return (c, 0, 0)

    kernel = functools.partial(
        _loss_ls_kernel,
        confidence=float(confidence),
        off_value=float(off_value),
        label_entropy=float(label_entropy),
        n_rows=N,
        tile_rows=tile_rows,
        tiles_per_core=tiles_per_core,
    )

    num_out = pl.pallas_call(
        kernel,
        out_shape=jax.ShapeDtypeStruct((num_cores, 8, 128), jnp.float32),
        grid_spec=pltpu.PrefetchScalarGridSpec(
            num_scalar_prefetch=0,
            grid=(num_cores, tiles_per_core),
            in_specs=[
                pl.BlockSpec((tile_rows, V), row_block),
                pl.BlockSpec((tile_rows, 1), row_block),
                pl.BlockSpec((tile_rows, 1), row_block),
            ],
            out_specs=pl.BlockSpec((1, 8, 128), out_block),
            scratch_shapes=[
                pltpu.VMEM((tile_rows, 1), jnp.float32),   # numerator accumulator
            ],
        ),
        compiler_params=pltpu.CompilerParams(
            dimension_semantics=("parallel", "arbitrary"),
            vmem_limit_bytes=vmem_limit),
    )(pred, tgt, msk)

    num = jnp.sum(num_out[:, 0, 0])
    den = jnp.sum(msk.astype(jnp.float32))   # tiny (N floats); wrapper-side sum
    return num / den


def _reference_loss(prediction, target, mask, smooth):
    B, T, V = prediction.shape
    confidence = 1.0 - smooth
    off_value = smooth / (V - 1)
    pred = prediction.reshape(-1, V).astype(jnp.float32)
    tgt = target.reshape(-1)
    msk = mask.reshape(-1).astype(jnp.float32)
    labels = jnp.full_like(pred, off_value)
    labels = labels.at[jnp.arange(pred.shape[0]), tgt].set(confidence)
    log_labels = jnp.where(labels > 0, jnp.log(labels), 0.0)
    loss = labels * log_labels - labels * pred
    return (loss.sum(1) * msk).sum() / msk.sum()


if __name__ == "__main__":
    key = jax.random.PRNGKey(0)
    B, T, V = 2, 8, 32   # batch, max_words, vocab_size (small test shapes)
    smooth = 0.1

    k1, k2, k3 = jax.random.split(key, 3)
    # prediction is assumed to be log-probabilities (as produced by log_softmax)
    logits = jax.random.normal(k1, (B, T, V), dtype=jnp.float32)
    prediction = jax.nn.log_softmax(logits, axis=-1)
    target = jax.random.randint(k2, (B, T), 0, V, dtype=jnp.int32)
    mask = (jax.random.uniform(k3, (B, T)) > 0.3).astype(jnp.float32)

    out = loss_with_ls(prediction, target, mask, smooth)
    out = jax.block_until_ready(out)

    ref = _reference_loss(prediction, target, mask, smooth)
    assert jnp.allclose(out, ref, rtol=1e-4, atol=1e-4), (out, ref)

    print("KERNEL_OK")
</pallas_src>

<mosaic_0001>
module attributes {stable_mosaic.version = 11 : i64} {
  func.func @_loss_ls_kernel(%arg0: i32, %arg1: i32, %arg2: memref<16x32xf32, #tpu.memory_space<vmem>>, %arg3: memref<16x1xi32, #tpu.memory_space<vmem>>, %arg4: memref<16x1xf32, #tpu.memory_space<vmem>>, %arg5: memref<1x8x128xf32, #tpu.memory_space<vmem>>, %arg6: memref<16x1xf32, #tpu.memory_space<vmem>>) attributes {dimension_semantics = [#tpu.dimension_semantics<parallel>, #tpu.dimension_semantics<arbitrary>], iteration_bounds = array<i64: 1, 1>, scalar_prefetch = 0 : i64, scratch_operands = 1 : i64, tpu.core_type = #tpu.core_type<tc>, window_params = [{transform_indices = @transform_0, window_bounds = array<i64: 16, 32>}, {transform_indices = @transform_1, window_bounds = array<i64: 16, 1>}, {transform_indices = @transform_2, window_bounds = array<i64: 16, 1>}, {transform_indices = @transform_3, window_bounds = array<i64: 1, 8, 128>}]} {
    %c0_i32 = arith.constant 0 : i32
    %0 = arith.cmpi eq, %arg1, %c0_i32 : i32
    %1 = arith.extui %0 : i1 to i32
    %c0_i32_0 = arith.constant 0 : i32
    %2 = arith.cmpi ne, %1, %c0_i32_0 : i32
    scf.if %2 {
      %cst_17 = arith.constant 0.000000e+00 : f32
      %34 = vector.broadcast %cst_17 : f32 to vector<16x1xf32>
      %c0_18 = arith.constant 0 : index
      %c0_19 = arith.constant 0 : index
      %35 = vector.load %arg6[%c0_18, %c0_19] : memref<16x1xf32, #tpu.memory_space<vmem>>, vector<16x1xf32>
      tpu.vector_store %arg6[%c0_18, %c0_19], %34 {strides = array<i32>} : memref<16x1xf32, #tpu.memory_space<vmem>>, vector<16x1xf32>,
    } else {
    }
    %c0 = arith.constant 0 : index
    %c0_1 = arith.constant 0 : index
    %3 = vector.load %arg3[%c0, %c0_1] : memref<16x1xi32, #tpu.memory_space<vmem>>, vector<16x1xi32>
    %c0_2 = arith.constant 0 : index
    %c0_3 = arith.constant 0 : index
    %4 = vector.load %arg4[%c0_2, %c0_3] : memref<16x1xf32, #tpu.memory_space<vmem>>, vector<16x1xf32>
    %c1_i32 = arith.constant 1 : i32
    %5 = arith.muli %arg0, %c1_i32 : i32
    %6 = arith.addi %5, %arg1 : i32
    %c16_i32 = arith.constant 16 : i32
    %7 = arith.muli %6, %c16_i32 : i32
    %8 = tpu.iota {dimensions = array<i32: 0>} : vector<16x1xi32>
    %9 = vector.broadcast %7 : i32 to vector<16x1xi32>
    %10 = arith.addi %9, %8 : vector<16x1xi32>
    %c16_i32_4 = arith.constant 16 : i32
    %11 = vector.broadcast %c16_i32_4 : i32 to vector<16x1xi32>
    %12 = arith.cmpi slt, %10, %11 : vector<16x1xi32>
    %13 = tpu.iota {dimensions = array<i32: 1>} : vector<16x32xi32>
    %14 = vector.broadcast %3 : vector<16x1xi32> to vector<16x32xi32>
    %15 = arith.cmpi eq, %13, %14 : vector<16x32xi32>
    %cst = arith.constant 0.899999976 : f32
    %cst_5 = arith.constant 0.0032258064 : f32
    %16 = vector.broadcast %cst : f32 to vector<16x32xf32>
    %17 = vector.broadcast %cst_5 : f32 to vector<16x32xf32>
    %18 = arith.select %15, %16, %17 : vector<16x32xi1>, vector<16x32xf32>
    %c0_6 = arith.constant 0 : index
    %c0_7 = arith.constant 0 : index
    %19 = vector.load %arg2[%c0_6, %c0_7] : memref<16x32xf32, #tpu.memory_space<vmem>>, vector<16x32xf32>
    %20 = arith.mulf %18, %19 : vector<16x32xf32>
    %cst_8 = arith.constant dense<0.000000e+00> : vector<16xf32>
    %21 = vector.multi_reduction <add>, %20, %cst_8 [1] : vector<16x32xf32> to vector<16xf32>
    %22 = vector.shape_cast %21 : vector<16xf32> to vector<16x1xf32>
    %cst_9 = arith.constant -0.668481708 : f32
    %23 = vector.broadcast %cst_9 : f32 to vector<16x1xf32>
    %24 = arith.subf %23, %22 : vector<16x1xf32>
    %c0_10 = arith.constant 0 : index
    %c0_11 = arith.constant 0 : index
    %25 = vector.load %arg6[%c0_10, %c0_11] : memref<16x1xf32, #tpu.memory_space<vmem>>, vector<16x1xf32>
    %26 = arith.mulf %24, %4 : vector<16x1xf32>
    %cst_12 = arith.constant 0.000000e+00 : f32
    %27 = vector.broadcast %cst_12 : f32 to vector<16x1xf32>
    %28 = arith.select %12, %26, %27 : vector<16x1xi1>, vector<16x1xf32>
    %29 = arith.addf %25, %28 : vector<16x1xf32>
    %c0_13 = arith.constant 0 : index
    %c0_14 = arith.constant 0 : index
    %30 = vector.load %arg6[%c0_13, %c0_14] : memref<16x1xf32, #tpu.memory_space<vmem>>, vector<16x1xf32>
    tpu.vector_store %arg6[%c0_13, %c0_14], %29 {strides = array<i32>} : memref<16x1xf32, #tpu.memory_space<vmem>>, vector<16x1xf32>,
    %c0_i32_15 = arith.constant 0 : i32
    %31 = arith.cmpi eq, %arg1, %c0_i32_15 : i32
    %32 = arith.extui %31 : i1 to i32
    %c0_i32_16 = arith.constant 0 : i32
    %33 = arith.cmpi ne, %32, %c0_i32_16 : i32
    scf.if %33 {
      %c0_17 = arith.constant 0 : index
      %c0_18 = arith.constant 0 : index
      %34 = vector.load %arg6[%c0_17, %c0_18] : memref<16x1xf32, #tpu.memory_space<vmem>>, vector<16x1xf32>
      %35 = vector.shape_cast %34 : vector<16x1xf32> to vector<1x16x1xf32>
      %cst_19 = arith.constant dense<0.000000e+00> : vector<1xf32>
      %36 = vector.multi_reduction <add>, %35, %cst_19 [1, 2] : vector<1x16x1xf32> to vector<1xf32>
      %37 = vector.shape_cast %36 : vector<1xf32> to vector<1x1x1xf32>
      %38 = vector.extract %37[0, 0, 0] : f32 from vector<1x1x1xf32>
      %39 = vector.broadcast %38 : f32 to vector<1x8x128xf32>
      %c0_20 = arith.constant 0 : index
      %c0_21 = arith.constant 0 : index
      %c0_22 = arith.constant 0 : index
      %40 = vector.load %arg5[%c0_20, %c0_21, %c0_22] : memref<1x8x128xf32, #tpu.memory_space<vmem>>, vector<1x8x128xf32>
      tpu.vector_store %arg5[%c0_20, %c0_21, %c0_22], %39 {strides = array<i32>} : memref<1x8x128xf32, #tpu.memory_space<vmem>>, vector<1x8x128xf32>,
    } else {
    }
    return
  }
  func.func @transform_0(%arg0: i32, %arg1: i32) -> (i32, i32) {
    %c1_i32 = arith.constant 1 : i32
    %0 = arith.muli %arg0, %c1_i32 : i32
    %1 = arith.addi %0, %arg1 : i32
    %c0_i32 = arith.constant 0 : i32
    %2 = arith.minsi %1, %c0_i32 : i32
    %c0_i32_0 = arith.constant 0 : i32
    %c0_i32_1 = arith.constant 0 : i32
    return %2, %c0_i32_0 : i32, i32
  }
  func.func @transform_1(%arg0: i32, %arg1: i32) -> (i32, i32) {
    %c1_i32 = arith.constant 1 : i32
    %0 = arith.muli %arg0, %c1_i32 : i32
    %1 = arith.addi %0, %arg1 : i32
    %c0_i32 = arith.constant 0 : i32
    %2 = arith.minsi %1, %c0_i32 : i32
    %c0_i32_0 = arith.constant 0 : i32
    %c0_i32_1 = arith.constant 0 : i32
    return %2, %c0_i32_0 : i32, i32
  }
  func.func @transform_2(%arg0: i32, %arg1: i32) -> (i32, i32) {
    %c1_i32 = arith.constant 1 : i32
    %0 = arith.muli %arg0, %c1_i32 : i32
    %1 = arith.addi %0, %arg1 : i32
    %c0_i32 = arith.constant 0 : i32
    %2 = arith.minsi %1, %c0_i32 : i32
    %c0_i32_0 = arith.constant 0 : i32
    %c0_i32_1 = arith.constant 0 : i32
    return %2, %c0_i32_0 : i32, i32
  }
  func.func @transform_3(%arg0: i32, %arg1: i32) -> (i32, i32, i32) {
    %c0_i32 = arith.constant 0 : i32
    %c0_i32_0 = arith.constant 0 : i32
    %c0_i32_1 = arith.constant 0 : i32
    return %arg0, %c0_i32, %c0_i32_0 : i32, i32, i32
  }
}

</mosaic_0001>

<llo_original>
// kernel: tpu_custom_call.1
$region0: #{tpu_custom_call.1}
  #allocation0 [shape = 'u32[]', space=smem, size = 0x4, offset = 0x4, fixed_abs, tag = 'smem constant byte address 0x4 - core index']
  #allocation1 [shape = 'u32[144,128]{1,0:T(1,128)}', space=vmem, size = 0x12000, scoped, tag = 'internal scratch']
  #allocation2 [shape = 'f32[16,1]{1,0:T(8,128)}', space=vmem, size = 0x2000, scoped, tag = 'scratch operand']
  %s0 = inlined_call_operand.vmem [shape: f32[16,32], index: 0, kind: input, shape index: {}]
  %s1 = inlined_call_operand.vmem [shape: s32[16,1], index: 1, kind: input, shape index: {}]
  %s2 = inlined_call_operand.vmem [shape: f32[16,1], index: 2, kind: input, shape index: {}]
  %s3 = inlined_call_operand.hbm [shape: f32[1,8,128], index: 3, kind: output, shape index: {}]
  %s4 = sld [smem:[#allocation0]]
  $region30: #{tpu_custom_call.1} parent=0
    _
  %s6 = ssub.s32 1, %s4
  %s7 = scalar_select 0, %s6, %s4
  $region1: #{tpu_custom_call.1} parent=0
    #allocation3 [shape = 'u8[4096]{0}', space=vmem, size = 0x1000, scoped, tag = 'output window, operand 0, single buffered']
    #allocation4 [shape = 's32[1]{0}', space=sflag, size = 0x4, scoped, tag = 'scoped memory for tpu_custom_call.1']
    %8 = vsyncpa [#allocation4], 0
    // Predicated region
    $region2: #{tpu_custom_call.1} parent=1 // pred_check
      _
    $region3: #{tpu_custom_call.1} parent=1 // pred_check_branch
      %10 = sbr.rel (0) target = $region5
    $region4: #{tpu_custom_call.1} parent=1 // pred_region
      %s11 = sadd.s32 0, 0
      %p12 = scmp.lt.s32.totalorder %s11, 0
      %s13 = scalar_select %p12, %s11, 0
      %s14 = smul.u32 2, %s13
      %p15 = scmp.lt.s32.totalorder %s14, 1
      %s16 = scalar_select %p15, %s14, 1
      %s17 = smul.addr %s16, 8
      %s18 = scalar_lea.vmem %s0, %s17
      %s19 = sadd.s32 0, 0
      %p20 = scmp.lt.s32.totalorder %s19, 0
      %s21 = scalar_select %p20, %s19, 0
      %s22 = smul.u32 2, %s21
    $region5: #{tpu_custom_call.1} parent=1 // pred_fallthru
      _
    // Predicated region
    $region6: #{tpu_custom_call.1} parent=1 // pred_check
      _
    $region7: #{tpu_custom_call.1} parent=1 // pred_check_branch
      %24 = sbr.rel (0) target = $region9
    $region8: #{tpu_custom_call.1} parent=1 // pred_region
      %s25 = sadd.s32 0, 0
      %p26 = scmp.lt.s32.totalorder %s25, 0
      %s27 = scalar_select %p26, %s25, 0
      %s28 = smul.u32 2, %s27
      %p29 = scmp.lt.s32.totalorder %s28, 1
      %s30 = scalar_select %p29, %s28, 1
      %s31 = smul.addr %s30, 8
      %s32 = scalar_lea.vmem %s1, %s31
      %s33 = sadd.s32 0, 0
      %p34 = scmp.lt.s32.totalorder %s33, 0
      %s35 = scalar_select %p34, %s33, 0
      %s36 = smul.u32 2, %s35
    $region9: #{tpu_custom_call.1} parent=1 // pred_fallthru
      _
    // Predicated region
    $region10: #{tpu_custom_call.1} parent=1 // pred_check
      _
    $region11: #{tpu_custom_call.1} parent=1 // pred_check_branch
      %38 = sbr.rel (0) target = $region13
    $region12: #{tpu_custom_call.1} parent=1 // pred_region
      %s39 = sadd.s32 0, 0
      %p40 = scmp.lt.s32.totalorder %s39, 0
      %s41 = scalar_select %p40, %s39, 0
      %s42 = smul.u32 2, %s41
      %p43 = scmp.lt.s32.totalorder %s42, 1
      %s44 = scalar_select %p43, %s42, 1
      %s45 = smul.addr %s44, 8
      %s46 = scalar_lea.vmem %s2, %s45
      %s47 = sadd.s32 0, 0
      %p48 = scmp.lt.s32.totalorder %s47, 0
      %s49 = scalar_select %p48, %s47, 0
      %s50 = smul.u32 2, %s49
    $region13: #{tpu_custom_call.1} parent=1 // pred_fallthru
      _
    %s51 = sadd.s32 0, 0
    %p52 = scmp.lt.s32.totalorder %s51, 0
    %s53 = scalar_select %p52, %s51, 0
    %s54 = smul.u32 2, %s53
    %p55 = scmp.lt.s32.totalorder %s54, 1
    %s56 = scalar_select %p55, %s54, 1
    %s57 = smul.addr %s56, 8
    %s58 = scalar_lea.vmem %s0, %s57
    %s59 = sadd.s32 0, 0
    %p60 = scmp.lt.s32.totalorder %s59, 0
    %s61 = scalar_select %p60, %s59, 0
    %s62 = smul.u32 2, %s61
    %p63 = scmp.lt.s32.totalorder %s62, 1
    %s64 = scalar_select %p63, %s62, 1
    %s65 = smul.addr %s64, 8
    %s66 = scalar_lea.vmem %s1, %s65
    %s67 = sadd.s32 0, 0
    %p68 = scmp.lt.s32.totalorder %s67, 0
    %s69 = scalar_select %p68, %s67, 0
    %s70 = smul.u32 2, %s69
    %p71 = scmp.lt.s32.totalorder %s70, 1
    %s72 = scalar_select %p71, %s70, 1
    %s73 = smul.addr %s72, 8
    %s74 = scalar_lea.vmem %s2, %s73
    %s75 = sadd.s32 0, 0
    %p76 = scmp.lt.s32.totalorder %s75, 0
    %s77 = scalar_select %p76, %s75, 0
    %s78 = smul.u32 2, %s77
    %p79 = scmp.lt.s32.totalorder %s78, 1
    %s80 = scalar_select %p79, %s78, 1
    %s81 = smul.addr %s80, 8
    %s82 = scalar_lea.vmem %s0, %s81
    %s83 = sadd.s32 0, 0
    %p84 = scmp.lt.s32.totalorder %s83, 0
    %s85 = scalar_select %p84, %s83, 0
    %s86 = smul.u32 2, %s85
    %s87 = sadd.s32 0, 0
    %p88 = scmp.lt.s32.totalorder %s87, 0
    %s89 = scalar_select %p88, %s87, 0
    %s90 = smul.u32 2, %s89
    %p91 = scmp.lt.s32.totalorder %s90, 1
    %s92 = scalar_select %p91, %s90, 1
    %s93 = smul.addr %s92, 8
    %s94 = scalar_lea.vmem %s1, %s93
    %s95 = sadd.s32 0, 0
    %p96 = scmp.lt.s32.totalorder %s95, 0
    %s97 = scalar_select %p96, %s95, 0
    %s98 = smul.u32 2, %s97
    %s99 = sadd.s32 0, 0
    %p100 = scmp.lt.s32.totalorder %s99, 0
    %s101 = scalar_select %p100, %s99, 0
    %s102 = smul.u32 2, %s101
    %p103 = scmp.lt.s32.totalorder %s102, 1
    %s104 = scalar_select %p103, %s102, 1
    %s105 = smul.addr %s104, 8
    %s106 = scalar_lea.vmem %s2, %s105
    %s107 = sadd.s32 0, 0
    %p108 = scmp.lt.s32.totalorder %s107, 0
    %s109 = scalar_select %p108, %s107, 0
    %s110 = smul.u32 2, %s109
    %p111 = scmp.eq.s32.totalorder 0, 0
    // Predicated region
    $region14: #{tpu_custom_call.1} parent=1 // pred_check
      %p112 = pneg %p111
    $region15: #{tpu_custom_call.1} parent=1 // pred_check_branch
      %114 = sbr.rel (%p112) target = $region17
    $region16: #{tpu_custom_call.1} parent=1 // pred_region
      %vm115 = vcmask 7168
      %116 = vst.msk [vmem:[#allocation2] sm:$0xff] %vm115, 0.0
      %117 = vst.msk [vmem:[#allocation2 + $0x8] sm:$0xff] %vm115, 0.0
    $region17: #{tpu_custom_call.1} parent=1 // pred_fallthru
      _
    %v118 = vld [vmem:[%s94] sm:$0xff]
    %v119 = vld [vmem:[%s94 + $0x8] sm:$0xff]
    %v120 = vld [vmem:[%s106] sm:$0xff]
    %v121 = vld [vmem:[%s106 + $0x8] sm:$0xff]
    %s122 = sadd.s32 0, 0
    %s123 = smul.u32 %s122, 16
    %v124 = vlaneseq
    %v125 = vshrl.u32 %v124, 7
    %v126 = vadd.s32 %v125, 8
    %v127 = vstv %s123
    %v128 = vadd.s32 %v127, %v125
    %v129 = vadd.s32 %v127, %v126
    %vm130 = vcmp.lt.s32.totalorder %v128, 16
    %vm131 = vcmp.lt.s32.totalorder %v129, 16
    %v132 = vlaneseq
    %v133 = vand.u32 %v132, 127
    %134 = vset.pattern.permute.xlu0 0
    %135 = vperm.xlu0 %134, %v118
    %v136 = vpop.permute.xlu0 %135
    %137 = vset.pattern.permute.xlu0 0
    %138 = vperm.xlu0 %137, %v119
    %v139 = vpop.permute.xlu0 %138
    %vm140 = vcmp.eq.s32.totalorder %v133, %v136
    %vm141 = vcmp.eq.s32.totalorder %v133, %v139
    %v142 = vsel %vm140, 0.9, 0.0032258064
    %v143 = vsel %vm141, 0.9, 0.0032258064
    %v144 = vld [vmem:[%s82] sm:$0xff]
    %v145 = vld [vmem:[%s82 + $0x8] sm:$0xff]
    %v146 = vmul.f32 %v142, %v144
    %v147 = vmul.f32 %v143, %v145
    %vm148 = vcmask 261120
    %v149 = vsel %vm148, %v146, 0.0
    %150 = vadd.xlane.f32.xlu0 %v149
    %v151 = vpop.xlane.xlu0 %150
    %v152 = vsel %vm148, %v147, 0.0
    %153 = vadd.xlane.f32.xlu0 %v152
    %v154 = vpop.xlane.xlu0 %153
    %v155 = vsub.f32 -0.6684817, %v151
    %v156 = vsub.f32 -0.6684817, %v154
    %v157 = vld [vmem:[#allocation2] sm:$0xff]
    %v158 = vld [vmem:[#allocation2 + $0x8] sm:$0xff]
    %v159 = vmul.f32 %v155, %v120
    %v160 = vmul.f32 %v156, %v121
    %v161 = vsel %vm130, %v159, 0.0
    %v162 = vsel %vm131, %v160, 0.0
    %v163 = vadd.f32 %v157, %v161
    %v164 = vadd.f32 %v158, %v162
    %vm165 = vcmask 7168
    %166 = vst.msk [vmem:[#allocation2] sm:$0xff] %vm165, %v163
    %167 = vst.msk [vmem:[#allocation2 + $0x8] sm:$0xff] %vm165, %v164
    // Predicated region
    $region18: #{tpu_custom_call.1} parent=1 // pred_check
      %p168 = pneg %p111
    $region19: #{tpu_custom_call.1} parent=1 // pred_check_branch
      %170 = sbr.rel (%p168) target = $region21
    $region20: #{tpu_custom_call.1} parent=1 // pred_region
      %v171 = vld [vmem:[#allocation2] sm:$0xff]
      %v172 = vld [vmem:[#allocation2 + $0x8] sm:$0xff]
      %v173 = vsel %vm165, %v171, 0.0
      %v174 = vsel %vm165, %v172, 0.0
      %v175 = vadd.f32 %v173, %v174
      %176 = vadd.xlane.f32.xlu0 %v175
      %v177 = vpop.xlane.xlu0 %176
      %v178 = vrot.slane %v177, 4
      %v179 = vadd.f32 %v177, %v178
      %v180 = vrot.slane %v179, 2
      %v181 = vadd.f32 %v179, %v180
      %v182 = vrot.slane %v181, 1
      %v183 = vadd.f32 %v181, %v182
      %s184 = vtos %v183
      %v185 = vstv %s184
      %186 = vst [vmem:[#allocation3] sm:$0xff] %v185
    $region21: #{tpu_custom_call.1} parent=1 // pred_fallthru
      _
    // Predicated region
    $region22: #{tpu_custom_call.1} parent=1 // pred_check
      _
    $region23: #{tpu_custom_call.1} parent=1 // pred_check_branch
      %188 = sbr.rel (0) target = $region25
    $region24: #{tpu_custom_call.1} parent=1 // pred_region
      %s190 = ssub.s32 128, 128
      %191 = vsyncadd [#allocation4], %s190
      %s193 = sshll.u32 [#allocation3], 4
      %s194 = int_to_ptr.vmem [resolvable:$true] %s193
      %196 = dma.vmem_to_hbm [thread:$0]  %s194, 128, %s3, [#allocation4]
    $region25: #{tpu_custom_call.1} parent=1 // pred_fallthru
      _
    // Predicated region
    $region26: #{tpu_custom_call.1} parent=1 // pred_check
      _
    $region27: #{tpu_custom_call.1} parent=1 // pred_check_branch
      %198 = sbr.rel (0) target = $region29
    $region28: #{tpu_custom_call.1} parent=1 // pred_region
      %199 = dma.done [#allocation4], 128
    $region29: #{tpu_custom_call.1} parent=1 // pred_fallthru
      _
    %200 = vsyncpa [#allocation4], 1

</llo_original>
